<compile_context>
chip_gen: v5e
topology: v5e:2x2
jax: 0.10.0
libtpu: 0.0.40
codegen_flags: <defaults>
</compile_context>

<pallas_src>
import functools

import jax
import jax.numpy as jnp
from jax.experimental import pallas as pl
from jax.experimental.pallas import tpu as pltpu


def _round_up(x, m):
    return ((x + m - 1) // m) * m


def fasttext_forward(out_word, out_bigram, out_trigram, w1, b1, w2, b2, *,
                     seq_len, num_classes, batch_tile, seq_tile):
    """out_* : (B_pad, S_pad, E_pad) bf16 (zero padded)
       w1    : (3*E_pad, H_pad) f32, b1: (1, H_pad) f32
       w2    : (H_pad, C_pad) f32,   b2: (1, C_pad) f32
       returns (B_pad, C_pad) f32 log-probs (padded classes masked)."""
    B_pad, S_pad, E_pad = out_word.shape
    H_pad = w1.shape[1]
    C_pad = w2.shape[1]
    nb = B_pad // batch_tile
    ns = S_pad // seq_tile
    inv_seq = 1.0 / float(seq_len)   # mean over the *true* sequence length

    def kernel(w_ref, bg_ref, tg_ref, w1_ref, b1_ref, w2_ref, b2_ref,
               out_ref, acc_ref):
        s = pl.program_id(1)

        @pl.when(s == 0)
        def _():
            acc_ref[...] = jnp.zeros_like(acc_ref)

        # Sequence-sum of this (TB, TS, E_pad) tile; upcast to f32 before the
        # reduction (bf16 carried through HBM, accumulation in f32).
        sw = jnp.sum(w_ref[...].astype(jnp.float32), axis=1)
        sb = jnp.sum(bg_ref[...].astype(jnp.float32), axis=1)
        st = jnp.sum(tg_ref[...].astype(jnp.float32), axis=1)
        acc_ref[:, 0:E_pad] += sw
        acc_ref[:, E_pad:2 * E_pad] += sb
        acc_ref[:, 2 * E_pad:3 * E_pad] += st

        @pl.when(s == pl.num_programs(1) - 1)
        def _():
            # mean-pool  (padded seq positions are zeros, so /seq_len is exact)
            pooled = acc_ref[...] * inv_seq                    # (TB, 3*E_pad) f32
            # dropout: identity (eval mode)
            # TODO(synk): stochastic dropout via pltpu.prng_* if training
            # semantics are ever needed.
            h = jnp.dot(pooled, w1_ref[...],
                        preferred_element_type=jnp.float32) + b1_ref[...]
            h = jnp.maximum(h, 0.0)
            logits = jnp.dot(h, w2_ref[...],
                             preferred_element_type=jnp.float32) + b2_ref[...]
            # mask padded class lanes, then numerically stable log_softmax
            lane = jax.lax.broadcasted_iota(jnp.int32, logits.shape, 1)
            logits = jnp.where(lane < num_classes, logits, -1e30)
            m = jnp.max(logits, axis=-1, keepdims=True)
            shifted = logits - m
            lse = jnp.log(jnp.sum(jnp.exp(shifted), axis=-1, keepdims=True))
            out_ref[...] = shifted - lse

    feat_spec = pl.BlockSpec((batch_tile, seq_tile, E_pad),
                             lambda b, s: (b, s, 0))

    def resident(shape):   # weights: constant block index -> DMA'd once, stay in VMEM
        return pl.BlockSpec(shape, lambda b, s: (0, 0))

    return pl.pallas_call(
        kernel,
        out_shape=jax.ShapeDtypeStruct((B_pad, C_pad), jnp.float32),
        grid_spec=pltpu.PrefetchScalarGridSpec(
            num_scalar_prefetch=0,
            grid=(nb, ns),
            in_specs=[feat_spec, feat_spec, feat_spec,
                      resident((3 * E_pad, H_pad)),
                      resident((1, H_pad)),
                      resident((H_pad, C_pad)),
                      resident((1, C_pad))],
            out_specs=pl.BlockSpec((batch_tile, C_pad), lambda b, s: (b, 0)),
            scratch_shapes=[pltpu.VMEM((batch_tile, 3 * E_pad), jnp.float32)],
        ),
        compiler_params=pltpu.CompilerParams(
            dimension_semantics=("parallel", "arbitrary"),
            vmem_limit_bytes=32 * 1024 * 1024,
        ),
    )(out_word, out_bigram, out_trigram, w1, b1, w2, b2)


def model_apply(params, x, *, batch_tile=8, seq_tile=128):
    """x: (seq_len, batch) int32 token ids -> (batch, num_classes) log-probs."""
    xb = x.T                                           # (B, S), matches permute(1, 0)
    B, S = xb.shape
    E = params["emb_word"].shape[1]
    H = params["w1"].shape[1]
    C = params["w2"].shape[1]

    E_pad = _round_up(E, 128)
    H_pad = _round_up(H, 128)
    C_pad = _round_up(C, 128)
    TB = _round_up(batch_tile, 8)
    TS = min(_round_up(seq_tile, 8), _round_up(S, 8))
    B_pad = _round_up(B, TB)
    S_pad = _round_up(S, TS)

    # Embedding gathers (kept in XLA); features carried to the kernel in bf16.
    # TODO(synk): fuse the gather into the kernel (scalar-prefetched token ids +
    # manual DMA from HBM tables) to drop this HBM round trip entirely.
    ow = params["emb_word"][xb].astype(jnp.bfloat16)      # (B, S, E)
    ob = params["emb_ngram2"][xb].astype(jnp.bfloat16)
    ot = params["emb_ngram3"][xb].astype(jnp.bfloat16)

    def pad_feat(t):
        return jnp.pad(t, ((0, B_pad - B), (0, S_pad - S), (0, E_pad - E)))

    ow, ob, ot = pad_feat(ow), pad_feat(ob), pad_feat(ot)

    # Pad weights with zeros so padded feature/hidden/class lanes contribute 0.
    w1p = jnp.pad(params["w1"].reshape(3, E, H),
                  ((0, 0), (0, E_pad - E), (0, H_pad - H))).reshape(3 * E_pad, H_pad)
    b1p = jnp.pad(params["b1"], ((0, 0), (0, H_pad - H)))
    w2p = jnp.pad(params["w2"], ((0, H_pad - H), (0, C_pad - C)))
    b2p = jnp.pad(params["b2"], ((0, 0), (0, C_pad - C)))

    out = fasttext_forward(ow, ob, ot, w1p, b1p, w2p, b2p,
                           seq_len=S, num_classes=C,
                           batch_tile=TB, seq_tile=TS)
    return out[:B, :C]


def init_params(key, vocab_size, ngram_vocab, embed_size, hidden_size, num_classes):
    ks = jax.random.split(key, 7)
    # nn.Linear stores weight as (out, in); we build (in, out) directly so the
    # kernel computes x @ W + b, which is semantically identical.
    w1 = jax.random.normal(ks[0], (embed_size * 3, hidden_size), jnp.float32) * 0.02
    b1 = jax.random.normal(ks[1], (1, hidden_size), jnp.float32) * 0.02
    w2 = jax.random.normal(ks[2], (hidden_size, num_classes), jnp.float32) * 0.02
    b2 = jax.random.normal(ks[3], (1, num_classes), jnp.float32) * 0.02
    emb_word = jax.random.normal(ks[4], (vocab_size, embed_size), jnp.float32) * 0.1
    emb_ngram2 = jax.random.normal(ks[5], (ngram_vocab, embed_size), jnp.float32) * 0.1
    emb_ngram3 = jax.random.normal(ks[6], (ngram_vocab, embed_size), jnp.float32) * 0.1
    return {
        "w1": w1, "b1": b1, "w2": w2, "b2": b2,
        "emb_word": emb_word, "emb_ngram2": emb_ngram2, "emb_ngram3": emb_ngram3,
    }


if __name__ == "__main__":
    # Small, module-consistent shapes (real module: embed=300, hidden=256,
    # classes=4, n_gram_vocab=250499 — scaled down here for a synthetic run).
    SEQ_LEN = 16
    BATCH = 8
    VOCAB = 100
    NGRAM_VOCAB = 512
    EMBED = 64
    HIDDEN = 128
    NUM_CLASSES = 4

    key = jax.random.PRNGKey(0)
    k_params, k_x = jax.random.split(key)
    params = init_params(k_params, VOCAB, NGRAM_VOCAB, EMBED, HIDDEN, NUM_CLASSES)

    # x: (sentence_length, batch) int token ids (same ids reused for all three
    # embedding tables, as in the reference module's forward).
    x = jax.random.randint(k_x, (SEQ_LEN, BATCH), 0, VOCAB, dtype=jnp.int32)

    # seq_tile=8 -> two seq grid steps, exercising the pl.when accumulator path.
    logit = model_apply(params, x, batch_tile=8, seq_tile=8)
    logit = jax.block_until_ready(logit)

    # Pure-JAX reference with the same bf16 feature rounding, f32 math.
    xb = x.T
    feat = jnp.concatenate([params["emb_word"][xb],
                            params["emb_ngram2"][xb],
                            params["emb_ngram3"][xb]], axis=-1)
    feat = feat.astype(jnp.bfloat16).astype(jnp.float32)
    pooled = feat.mean(axis=1)
    h = jnp.maximum(pooled @ params["w1"] + params["b1"], 0.0)
    ref = jax.nn.log_softmax(h @ params["w2"] + params["b2"], axis=-1)

    assert logit.shape == (BATCH, NUM_CLASSES)
    row_sums = jnp.exp(logit).sum(axis=-1)
    assert bool(jnp.all(jnp.abs(row_sums - 1.0) < 1e-3))
    assert bool(jnp.max(jnp.abs(logit - ref)) < 5e-2)

    print("KERNEL_OK")
</pallas_src>

<mosaic_0001>
module attributes {stable_mosaic.version = 11 : i64} {
  func.func @kernel(%arg0: i32, %arg1: i32, %arg2: memref<8x8x128xbf16, #tpu.memory_space<vmem>>, %arg3: memref<8x8x128xbf16, #tpu.memory_space<vmem>>, %arg4: memref<8x8x128xbf16, #tpu.memory_space<vmem>>, %arg5: memref<384x128xf32, #tpu.memory_space<vmem>>, %arg6: memref<1x128xf32, #tpu.memory_space<vmem>>, %arg7: memref<128x128xf32, #tpu.memory_space<vmem>>, %arg8: memref<1x128xf32, #tpu.memory_space<vmem>>, %arg9: memref<8x128xf32, #tpu.memory_space<vmem>>, %arg10: memref<8x384xf32, #tpu.memory_space<vmem>>) attributes {dimension_semantics = [#tpu.dimension_semantics<parallel>, #tpu.dimension_semantics<arbitrary>], iteration_bounds = array<i64: 1, 2>, scalar_prefetch = 0 : i64, scratch_operands = 1 : i64, tpu.core_type = #tpu.core_type<tc>, window_params = [{transform_indices = @transform_0, window_bounds = array<i64: 8, 8, 128>}, {transform_indices = @transform_1, window_bounds = array<i64: 8, 8, 128>}, {transform_indices = @transform_2, window_bounds = array<i64: 8, 8, 128>}, {pipeline_mode = #tpu.pipeline_mode<synchronous>, transform_indices = @transform_3, window_bounds = array<i64: 384, 128>}, {pipeline_mode = #tpu.pipeline_mode<synchronous>, transform_indices = @transform_4, window_bounds = array<i64: 1, 128>}, {pipeline_mode = #tpu.pipeline_mode<synchronous>, transform_indices = @transform_5, window_bounds = array<i64: 128, 128>}, {pipeline_mode = #tpu.pipeline_mode<synchronous>, transform_indices = @transform_6, window_bounds = array<i64: 1, 128>}, {transform_indices = @transform_7, window_bounds = array<i64: 8, 128>}]} {
    %c0_i32 = arith.constant 0 : i32
    %0 = arith.cmpi eq, %arg1, %c0_i32 : i32
    %1 = arith.extui %0 : i1 to i32
    %c0_i32_0 = arith.constant 0 : i32
    %2 = arith.cmpi ne, %1, %c0_i32_0 : i32
    scf.if %2 {
      %cst_22 = arith.constant 0.000000e+00 : f32
      %24 = vector.broadcast %cst_22 : f32 to vector<8x384xf32>
      %c0_23 = arith.constant 0 : index
      %c0_24 = arith.constant 0 : index
      %25 = vector.load %arg10[%c0_23, %c0_24] : memref<8x384xf32, #tpu.memory_space<vmem>>, vector<8x384xf32>
      tpu.vector_store %arg10[%c0_23, %c0_24], %24 {strides = array<i32>} : memref<8x384xf32, #tpu.memory_space<vmem>>, vector<8x384xf32>,
    } else {
    }
    %c0 = arith.constant 0 : index
    %c0_1 = arith.constant 0 : index
    %c0_2 = arith.constant 0 : index
    %3 = vector.load %arg2[%c0, %c0_1, %c0_2] : memref<8x8x128xbf16, #tpu.memory_space<vmem>>, vector<8x8x128xbf16>
    %4 = arith.extf %3 : vector<8x8x128xbf16> to vector<8x8x128xf32>
    %cst = arith.constant dense<0.000000e+00> : vector<8x128xf32>
    %5 = vector.multi_reduction <add>, %4, %cst [1] : vector<8x8x128xf32> to vector<8x128xf32>
    %c0_3 = arith.constant 0 : index
    %c0_4 = arith.constant 0 : index
    %c0_5 = arith.constant 0 : index
    %6 = vector.load %arg3[%c0_3, %c0_4, %c0_5] : memref<8x8x128xbf16, #tpu.memory_space<vmem>>, vector<8x8x128xbf16>
    %7 = arith.extf %6 : vector<8x8x128xbf16> to vector<8x8x128xf32>
    %cst_6 = arith.constant dense<0.000000e+00> : vector<8x128xf32>
    %8 = vector.multi_reduction <add>, %7, %cst_6 [1] : vector<8x8x128xf32> to vector<8x128xf32>
    %c0_7 = arith.constant 0 : index
    %c0_8 = arith.constant 0 : index
    %c0_9 = arith.constant 0 : index
    %9 = vector.load %arg4[%c0_7, %c0_8, %c0_9] : memref<8x8x128xbf16, #tpu.memory_space<vmem>>, vector<8x8x128xbf16>
    %10 = arith.extf %9 : vector<8x8x128xbf16> to vector<8x8x128xf32>
    %cst_10 = arith.constant dense<0.000000e+00> : vector<8x128xf32>
    %11 = vector.multi_reduction <add>, %10, %cst_10 [1] : vector<8x8x128xf32> to vector<8x128xf32>
    %c0_11 = arith.constant 0 : index
    %c0_12 = arith.constant 0 : index
    %12 = vector.load %arg10[%c0_11, %c0_12] : memref<8x384xf32, #tpu.memory_space<vmem>>, vector<8x128xf32>
    %13 = arith.addf %12, %5 : vector<8x128xf32>
    %c0_13 = arith.constant 0 : index
    %c0_14 = arith.constant 0 : index
    %14 = vector.load %arg10[%c0_13, %c0_14] : memref<8x384xf32, #tpu.memory_space<vmem>>, vector<8x128xf32>
    tpu.vector_store %arg10[%c0_13, %c0_14], %13 {strides = array<i32>} : memref<8x384xf32, #tpu.memory_space<vmem>>, vector<8x128xf32>,
    %c0_15 = arith.constant 0 : index
    %c128 = arith.constant 128 : index
    %15 = vector.load %arg10[%c0_15, %c128] : memref<8x384xf32, #tpu.memory_space<vmem>>, vector<8x128xf32>
    %16 = arith.addf %15, %8 : vector<8x128xf32>
    %c0_16 = arith.constant 0 : index
    %c128_17 = arith.constant 128 : index
    %17 = vector.load %arg10[%c0_16, %c128_17] : memref<8x384xf32, #tpu.memory_space<vmem>>, vector<8x128xf32>
    tpu.vector_store %arg10[%c0_16, %c128_17], %16 {strides = array<i32>} : memref<8x384xf32, #tpu.memory_space<vmem>>, vector<8x128xf32>,
    %c0_18 = arith.constant 0 : index
    %c256 = arith.constant 256 : index
    %18 = vector.load %arg10[%c0_18, %c256] : memref<8x384xf32, #tpu.memory_space<vmem>>, vector<8x128xf32>
    %19 = arith.addf %18, %11 : vector<8x128xf32>
    %c0_19 = arith.constant 0 : index
    %c256_20 = arith.constant 256 : index
    %20 = vector.load %arg10[%c0_19, %c256_20] : memref<8x384xf32, #tpu.memory_space<vmem>>, vector<8x128xf32>
    tpu.vector_store %arg10[%c0_19, %c256_20], %19 {strides = array<i32>} : memref<8x384xf32, #tpu.memory_space<vmem>>, vector<8x128xf32>,
    %c1_i32 = arith.constant 1 : i32
    %21 = arith.cmpi eq, %arg1, %c1_i32 : i32
    %22 = arith.extui %21 : i1 to i32
    %c0_i32_21 = arith.constant 0 : i32
    %23 = arith.cmpi ne, %22, %c0_i32_21 : i32
    scf.if %23 {
      %c0_22 = arith.constant 0 : index
      %c0_23 = arith.constant 0 : index
      %24 = vector.load %arg10[%c0_22, %c0_23] : memref<8x384xf32, #tpu.memory_space<vmem>>, vector<8x384xf32>
      %cst_24 = arith.constant 6.250000e-02 : f32
      %25 = vector.broadcast %cst_24 : f32 to vector<8x384xf32>
      %26 = arith.mulf %24, %25 : vector<8x384xf32>
      %c0_25 = arith.constant 0 : index
      %c0_26 = arith.constant 0 : index
      %27 = vector.load %arg5[%c0_25, %c0_26] : memref<384x128xf32, #tpu.memory_space<vmem>>, vector<384x128xf32>
      %cst_27 = arith.constant dense<0.000000e+00> : vector<8x128xf32>
      %28 = tpu.matmul %26, %27, %cst_27 {dimension_numbers = #tpu.dot_dimension_numbers<[1], [0], [0], [1], [0, 0, 1, 1], [], []>} : vector<8x384xf32>, vector<384x128xf32>, vector<8x128xf32> -> vector<8x128xf32>
      %c0_28 = arith.constant 0 : index
      %c0_29 = arith.constant 0 : index
      %29 = vector.load %arg6[%c0_28, %c0_29] : memref<1x128xf32, #tpu.memory_space<vmem>>, vector<1x128xf32>
      %30 = vector.broadcast %29 : vector<1x128xf32> to vector<8x128xf32>
      %31 = arith.addf %28, %30 : vector<8x128xf32>
      %cst_30 = arith.constant 0.000000e+00 : f32
      %32 = vector.broadcast %cst_30 : f32 to vector<8x128xf32>
      %33 = arith.maximumf %31, %32 : vector<8x128xf32>
      %c0_31 = arith.constant 0 : index
      %c0_32 = arith.constant 0 : index
      %34 = vector.load %arg7[%c0_31, %c0_32] : memref<128x128xf32, #tpu.memory_space<vmem>>, vector<128x128xf32>
      %cst_33 = arith.constant dense<0.000000e+00> : vector<8x128xf32>
      %35 = tpu.matmul %33, %34, %cst_33 {dimension_numbers = #tpu.dot_dimension_numbers<[1], [0], [0], [1], [0, 0, 1, 1], [], []>} : vector<8x128xf32>, vector<128x128xf32>, vector<8x128xf32> -> vector<8x128xf32>
      %c0_34 = arith.constant 0 : index
      %c0_35 = arith.constant 0 : index
      %36 = vector.load %arg8[%c0_34, %c0_35] : memref<1x128xf32, #tpu.memory_space<vmem>>, vector<1x128xf32>
      %37 = vector.broadcast %36 : vector<1x128xf32> to vector<8x128xf32>
      %38 = arith.addf %35, %37 : vector<8x128xf32>
      %39 = tpu.iota {dimensions = array<i32: 1>} : vector<8x128xi32>
      %c4_i32 = arith.constant 4 : i32
      %40 = vector.broadcast %c4_i32 : i32 to vector<8x128xi32>
      %41 = arith.cmpi slt, %39, %40 : vector<8x128xi32>
      %cst_36 = arith.constant -1.000000e+30 : f32
      %42 = vector.broadcast %cst_36 : f32 to vector<8x128xf32>
      %43 = arith.select %41, %38, %42 : vector<8x128xi1>, vector<8x128xf32>
      %cst_37 = arith.constant dense<0xFF800000> : vector<8xf32>
      %44 = vector.multi_reduction <maximumf>, %43, %cst_37 [1] : vector<8x128xf32> to vector<8xf32>
      %45 = vector.shape_cast %44 : vector<8xf32> to vector<8x1xf32>
      %46 = vector.broadcast %45 : vector<8x1xf32> to vector<8x128xf32>
      %47 = arith.subf %43, %46 : vector<8x128xf32>
      %48 = math.exp %47 : vector<8x128xf32>
      %cst_38 = arith.constant dense<0.000000e+00> : vector<8xf32>
      %49 = vector.multi_reduction <add>, %48, %cst_38 [1] : vector<8x128xf32> to vector<8xf32>
      %50 = vector.shape_cast %49 : vector<8xf32> to vector<8x1xf32>
      %51 = math.log %50 : vector<8x1xf32>
      %52 = vector.broadcast %51 : vector<8x1xf32> to vector<8x128xf32>
      %53 = arith.subf %47, %52 : vector<8x128xf32>
      %c0_39 = arith.constant 0 : index
      %c0_40 = arith.constant 0 : index
      %54 = vector.load %arg9[%c0_39, %c0_40] : memref<8x128xf32, #tpu.memory_space<vmem>>, vector<8x128xf32>
      tpu.vector_store %arg9[%c0_39, %c0_40], %53 {strides = array<i32>} : memref<8x128xf32, #tpu.memory_space<vmem>>, vector<8x128xf32>,
    } else {
    }
    return
  }
  func.func @transform_0(%arg0: i32, %arg1: i32) -> (i32, i32, i32) {
    %c0_i32 = arith.constant 0 : i32
    %c0_i32_0 = arith.constant 0 : i32
    return %arg0, %arg1, %c0_i32 : i32, i32, i32
  }
  func.func @transform_1(%arg0: i32, %arg1: i32) -> (i32, i32, i32) {
    %c0_i32 = arith.constant 0 : i32
    %c0_i32_0 = arith.constant 0 : i32
    return %arg0, %arg1, %c0_i32 : i32, i32, i32
  }
  func.func @transform_2(%arg0: i32, %arg1: i32) -> (i32, i32, i32) {
    %c0_i32 = arith.constant 0 : i32
    %c0_i32_0 = arith.constant 0 : i32
    return %arg0, %arg1, %c0_i32 : i32, i32, i32
  }
  func.func @transform_3(%arg0: i32, %arg1: i32) -> (i32, i32) {
    %c0_i32 = arith.constant 0 : i32
    %c0_i32_0 = arith.constant 0 : i32
    %c0_i32_1 = arith.constant 0 : i32
    return %c0_i32, %c0_i32_0 : i32, i32
  }
  func.func @transform_4(%arg0: i32, %arg1: i32) -> (i32, i32) {
    %c0_i32 = arith.constant 0 : i32
    %c0_i32_0 = arith.constant 0 : i32
    %c0_i32_1 = arith.constant 0 : i32
    return %c0_i32, %c0_i32_0 : i32, i32
  }
  func.func @transform_5(%arg0: i32, %arg1: i32) -> (i32, i32) {
    %c0_i32 = arith.constant 0 : i32
    %c0_i32_0 = arith.constant 0 : i32
    %c0_i32_1 = arith.constant 0 : i32
    return %c0_i32, %c0_i32_0 : i32, i32
  }
  func.func @transform_6(%arg0: i32, %arg1: i32) -> (i32, i32) {
    %c0_i32 = arith.constant 0 : i32
    %c0_i32_0 = arith.constant 0 : i32
    %c0_i32_1 = arith.constant 0 : i32
    return %c0_i32, %c0_i32_0 : i32, i32
  }
  func.func @transform_7(%arg0: i32, %arg1: i32) -> (i32, i32) {
    %c0_i32 = arith.constant 0 : i32
    %c0_i32_0 = arith.constant 0 : i32
    return %arg0, %c0_i32 : i32, i32
  }
}

</mosaic_0001>

<llo_original>
// kernel: tpu_custom_call.1
$region0: #{tpu_custom_call.1}
  #allocation0 [shape = 'u32[]', space=smem, size = 0x4, offset = 0x4, fixed_abs, tag = 'smem constant byte address 0x4 - core index']
  #allocation1 [shape = 'u32[72,128]{1,0:T(1,128)}', space=vmem, size = 0x9000, scoped, tag = 'internal scratch']
  #allocation2 [shape = 'f32[8,384]{1,0:T(8,128)}', space=vmem, size = 0x3000, scoped, tag = 'scratch operand']
  %s0 = inlined_call_operand.hbm [shape: bf16[8,16,128], index: 0, kind: input, shape index: {}]
  %s1 = inlined_call_operand.hbm [shape: bf16[8,16,128], index: 1, kind: input, shape index: {}]
  %s2 = inlined_call_operand.hbm [shape: bf16[8,16,128], index: 2, kind: input, shape index: {}]
  %s3 = inlined_call_operand.hbm [shape: f32[384,128], index: 3, kind: input, shape index: {}]
  %s4 = inlined_call_operand.vmem [shape: f32[1,128], index: 4, kind: input, shape index: {}]
  %s5 = inlined_call_operand.hbm [shape: f32[128,128], index: 5, kind: input, shape index: {}]
  %s6 = inlined_call_operand.vmem [shape: f32[1,128], index: 6, kind: input, shape index: {}]
  %s7 = inlined_call_operand.hbm [shape: f32[8,128], index: 7, kind: output, shape index: {}]
  %s8 = sld [smem:[#allocation0]]
  $region89: #{tpu_custom_call.1} parent=0
    _
  %s10 = ssub.s32 1, %s8
  %s11 = scalar_select 0, %s10, %s8
  $region1: #{tpu_custom_call.1} parent=0
    #allocation3 [shape = 'u8[32768]{0}', space=vmem, size = 0x8000, scoped, tag = 'input window, operand 0']
    #allocation4 [shape = 's32[2]{0}', space=sflag, size = 0x8, scoped, tag = 'scoped memory for tpu_custom_call.1']
    #allocation5 [shape = 's32[2]{0}', space=sflag, size = 0x8, scoped, tag = 'scoped memory for tpu_custom_call.1']
    #allocation6 [shape = 'u8[32768]{0}', space=vmem, size = 0x8000, scoped, tag = 'input window, operand 1']
    #allocation7 [shape = 's32[2]{0}', space=sflag, size = 0x8, scoped, tag = 'scoped memory for tpu_custom_call.1']
    #allocation8 [shape = 'u8[32768]{0}', space=vmem, size = 0x8000, scoped, tag = 'input window, operand 2']
    #allocation9 [shape = 'u8[196608]{0}', space=vmem, size = 0x30000, scoped, tag = 'input window, operand 3, single buffered']
    #allocation10 [shape = 's32[1]{0}', space=sflag, size = 0x4, scoped, tag = 'scoped memory for tpu_custom_call.1']
    #allocation11 [shape = 'u8[65536]{0}', space=vmem, size = 0x10000, scoped, tag = 'input window, operand 5, single buffered']
    #allocation12 [shape = 'u8[4096]{0}', space=vmem, size = 0x1000, scoped, tag = 'output window, operand 0, single buffered']
    %12 = vsyncpa [#allocation4], 0
    %s13 = scalar_lea.sflag [#allocation4], 1
    %14 = vsyncpa %s13, 0
    %15 = vsyncpa [#allocation7], 0
    %s16 = scalar_lea.sflag [#allocation7], 1
    %17 = vsyncpa %s16, 0
    %18 = vsyncpa [#allocation10], 0
    %19 = vsyncpa [#allocation5], 0
    loop: start=0, step=1, limit=4
    $region2: #{tpu_custom_call.1} parent=1 // loop_pre_header
      _
    $region3: #{tpu_custom_call.1} parent=1 // loop_header
      %s21 = sphi 0, %s25
      %p22 = scmp.ge.s32.totalorder %s21, 4
      %s28 = sphi 0, %s40
      %s29 = sphi 0, %s36
      %s30 = sphi 0, %s28
      %s31 = sphi 0, %s29
      %s32 = sphi 0, %s30
      %s33 = sphi 0, %s31
      %s45 = sphi 0, %s47
      %s48 = sphi 0, %s45
      %s49 = sphi 0, %s48
      %s65 = sphi 0, %s49
      %s73 = sphi 0, %s75
      %s76 = sphi 0, %s73
      %s77 = sphi 0, %s76
      %s93 = sphi 0, %s77
      %s101 = sphi 0, %s103
      %s104 = sphi 0, %s101
      %s105 = sphi 0, %s104
      %s121 = sphi 0, %s105
      %s125 = sphi 0, %s125
      %s127 = sphi 0, %s125
      %s128 = sphi 0, %s127
      %s142 = sphi 0, %s128
      %s146 = sphi 0, %s146
      %s148 = sphi 0, %s146
      %s149 = sphi 0, %s148
      %s163 = sphi 0, %s149
      %s167 = sphi 0, %s167
      %s169 = sphi 0, %s167
      %s170 = sphi 0, %s169
      %s184 = sphi 0, %s170
      %s188 = sphi 0, %s188
      %s190 = sphi 0, %s188
      %s191 = sphi 0, %s190
      %s205 = sphi 0, %s191
      %s211 = sphi 0, %s213
      %s214 = sphi 0, %s211
      %s215 = sphi 0, %s214
      %s231 = sphi 0, %s215
    $region4: #{tpu_custom_call.1} parent=1 // loop_header_branch
      %24 = sbr.rel (%p22) target = $region8
    $region5: #{tpu_custom_call.1} parent=1 // loop_body
      %s26 = ssub.s32 %s21, 1
      %s27 = ssub.s32 %s21, 2
      %s34 = sadd.s32 1, %s29
      %p35 = scmp.ge.s32.totalorder %s34, 2
      %s36 = scalar_select %p35, 0, %s34
      %s37 = sadd.s32 1, %s28
      %s38 = scalar_select %p35, %s37, %s28
      %p39 = scmp.ge.s32.totalorder %s38, 1
      %s40 = scalar_select %p39, 0, %s38
      %s41 = ssub.s32 %s28, %s40
      %s42 = ssub.s32 %s29, %s36
      %s43 = sor.u32 %s41, %s42
      %p44 = scmp.eq.s32.totalorder %s43, 0
      %s46 = sadd.s32 %s45, 1
      %s47 = scalar_select %p44, %s45, %s46
      %p50 = pneg %p44
      %p51 = scmp.eq.s32.totalorder %s21, 1
      %p52 = por %p50, %p51
      %p53 = scmp.ne.s32.totalorder %s45, %s48
      %p54 = scmp.eq.s32.totalorder %s21, 0
      %p55 = por %p53, %p54
      %p56 = scmp.ne.s32.totalorder %s45, %s48
      %p57 = scmp.eq.s32.totalorder %s26, 1
      %p58 = por %p56, %p57
      %p59 = scmp.ne.s32.totalorder %s48, %s49
      %p60 = scmp.eq.s32.totalorder %s26, 0
      %p61 = por %p59, %p60
      %p62 = scmp.ne.s32.totalorder %s48, %s49
      %p63 = scmp.eq.s32.totalorder %s27, 1
      %p64 = por %p62, %p63
      %p66 = scmp.ne.s32.totalorder %s49, %s65
      %p67 = scmp.eq.s32.totalorder %s27, 0
      %p68 = por %p66, %p67
      %s69 = ssub.s32 %s28, %s40
      %s70 = ssub.s32 %s29, %s36
      %s71 = sor.u32 %s69, %s70
      %p72 = scmp.eq.s32.totalorder %s71, 0
      %s74 = sadd.s32 %s73, 1
      %s75 = scalar_select %p72, %s73, %s74
      %p78 = pneg %p72
      %p79 = scmp.eq.s32.totalorder %s21, 1
      %p80 = por %p78, %p79
      %p81 = scmp.ne.s32.totalorder %s73, %s76
      %p82 = scmp.eq.s32.totalorder %s21, 0
      %p83 = por %p81, %p82
      %p84 = scmp.ne.s32.totalorder %s73, %s76
      %p85 = scmp.eq.s32.totalorder %s26, 1
      %p86 = por %p84, %p85
      %p87 = scmp.ne.s32.totalorder %s76, %s77
      %p88 = scmp.eq.s32.totalorder %s26, 0
      %p89 = por %p87, %p88
      %p90 = scmp.ne.s32.totalorder %s76, %s77
      %p91 = scmp.eq.s32.totalorder %s27, 1
      %p92 = por %p90, %p91
      %p94 = scmp.ne.s32.totalorder %s77, %s93
      %p95 = scmp.eq.s32.totalorder %s27, 0
      %p96 = por %p94, %p95
      %s97 = ssub.s32 %s28, %s40
      %s98 = ssub.s32 %s29, %s36
      %s99 = sor.u32 %s97, %s98
      %p100 = scmp.eq.s32.totalorder %s99, 0
      %s102 = sadd.s32 %s101, 1
      %s103 = scalar_select %p100, %s101, %s102
      %p106 = pneg %p100
      %p107 = scmp.eq.s32.totalorder %s21, 1
      %p108 = por %p106, %p107
      %p109 = scmp.ne.s32.totalorder %s101, %s104
      %p110 = scmp.eq.s32.totalorder %s21, 0
      %p111 = por %p109, %p110
      %p112 = scmp.ne.s32.totalorder %s101, %s104
      %p113 = scmp.eq.s32.totalorder %s26, 1
      %p114 = por %p112, %p113
      %p115 = scmp.ne.s32.totalorder %s104, %s105
      %p116 = scmp.eq.s32.totalorder %s26, 0
      %p117 = por %p115, %p116
      %p118 = scmp.ne.s32.totalorder %s104, %s105
      %p119 = scmp.eq.s32.totalorder %s27, 1
      %p120 = por %p118, %p119
      %p122 = scmp.ne.s32.totalorder %s105, %s121
      %p123 = scmp.eq.s32.totalorder %s27, 0
      %p124 = por %p122, %p123
      %s126 = sadd.s32 %s125, 1
      %p129 = scmp.eq.s32.totalorder %s21, 1
      %p130 = scmp.ne.s32.totalorder %s125, %s127
      %p131 = scmp.eq.s32.totalorder %s21, 0
      %p132 = por %p130, %p131
      %p133 = scmp.ne.s32.totalorder %s125, %s127
      %p134 = scmp.eq.s32.totalorder %s26, 1
      %p135 = por %p133, %p134
      %p136 = scmp.ne.s32.totalorder %s127, %s128
      %p137 = scmp.eq.s32.totalorder %s26, 0
      %p138 = por %p136, %p137
      %p139 = scmp.ne.s32.totalorder %s127, %s128
      %p140 = scmp.eq.s32.totalorder %s27, 1
      %p141 = por %p139, %p140
      %p143 = scmp.ne.s32.totalorder %s128, %s142
      %p144 = scmp.eq.s32.totalorder %s27, 0
      %p145 = por %p143, %p144
      %s147 = sadd.s32 %s146, 1
      %p150 = scmp.eq.s32.totalorder %s21, 1
      %p151 = scmp.ne.s32.totalorder %s146, %s148
      %p152 = scmp.eq.s32.totalorder %s21, 0
      %p153 = por %p151, %p152
      %p154 = scmp.ne.s32.totalorder %s146, %s148
      %p155 = scmp.eq.s32.totalorder %s26, 1
      %p156 = por %p154, %p155
      %p157 = scmp.ne.s32.totalorder %s148, %s149
      %p158 = scmp.eq.s32.totalorder %s26, 0
      %p159 = por %p157, %p158
      %p160 = scmp.ne.s32.totalorder %s148, %s149
      %p161 = scmp.eq.s32.totalorder %s27, 1
      %p162 = por %p160, %p161
      %p164 = scmp.ne.s32.totalorder %s149, %s163
      %p165 = scmp.eq.s32.totalorder %s27, 0
      %p166 = por %p164, %p165
      %s168 = sadd.s32 %s167, 1
      %p171 = scmp.eq.s32.totalorder %s21, 1
      %p172 = scmp.ne.s32.totalorder %s167, %s169
      %p173 = scmp.eq.s32.totalorder %s21, 0
      %p174 = por %p172, %p173
      %p175 = scmp.ne.s32.totalorder %s167, %s169
      %p176 = scmp.eq.s32.totalorder %s26, 1
      %p177 = por %p175, %p176
      %p178 = scmp.ne.s32.totalorder %s169, %s170
      %p179 = scmp.eq.s32.totalorder %s26, 0
      %p180 = por %p178, %p179
      %p181 = scmp.ne.s32.totalorder %s169, %s170
      %p182 = scmp.eq.s32.totalorder %s27, 1
      %p183 = por %p181, %p182
      %p185 = scmp.ne.s32.totalorder %s170, %s184
      %p186 = scmp.eq.s32.totalorder %s27, 0
      %p187 = por %p185, %p186
      %s189 = sadd.s32 %s188, 1
      %p192 = scmp.eq.s32.totalorder %s21, 1
      %p193 = scmp.ne.s32.totalorder %s188, %s190
      %p194 = scmp.eq.s32.totalorder %s21, 0
      %p195 = por %p193, %p194
      %p196 = scmp.ne.s32.totalorder %s188, %s190
      %p197 = scmp.eq.s32.totalorder %s26, 1
      %p198 = por %p196, %p197
      %p199 = scmp.ne.s32.totalorder %s190, %s191
      %p200 = scmp.eq.s32.totalorder %s26, 0
      %p201 = por %p199, %p200
      %p202 = scmp.ne.s32.totalorder %s190, %s191
      %p203 = scmp.eq.s32.totalorder %s27, 1
      %p204 = por %p202, %p203
      %p206 = scmp.ne.s32.totalorder %s191, %s205
      %p207 = scmp.eq.s32.totalorder %s27, 0
      %p208 = por %p206, %p207
      %s209 = ssub.s32 %s28, %s40
      %p210 = scmp.eq.s32.totalorder %s209, 0
      %s212 = sadd.s32 %s211, 1
      %s213 = scalar_select %p210, %s211, %s212
      %p216 = pneg %p210
      %p217 = scmp.eq.s32.totalorder %s21, 1
      %p218 = por %p216, %p217
      %p219 = scmp.ne.s32.totalorder %s211, %s214
      %p220 = scmp.eq.s32.totalorder %s21, 0
      %p221 = por %p219, %p220
      %p222 = scmp.ne.s32.totalorder %s211, %s214
      %p223 = scmp.eq.s32.totalorder %s26, 1
      %p224 = por %p222, %p223
      %p225 = scmp.ne.s32.totalorder %s214, %s215
      %p226 = scmp.eq.s32.totalorder %s26, 0
      %p227 = por %p225, %p226
      %p228 = scmp.ne.s32.totalorder %s214, %s215
      %p229 = scmp.eq.s32.totalorder %s27, 1
      %p230 = por %p228, %p229
      %p232 = scmp.ne.s32.totalorder %s215, %s231
      %p233 = scmp.eq.s32.totalorder %s27, 0
      %p234 = por %p232, %p233
      %p235 = scmp.le.s32.totalorder 1, %s21
      %p236 = scmp.lt.s32.totalorder %s21, 3
      %p237 = pnand %p235, %p236
      %p238 = pneg %p237
      // Predicated region
      $region9: #{tpu_custom_call.1} parent=5 // pred_check
        _
      $region10: #{tpu_custom_call.1} parent=5 // pred_check_branch
        %240 = sbr.rel (%p237) target = $region12
      $region11: #{tpu_custom_call.1} parent=5 // pred_region
        %s241 = ssub.s32 %s21, 1
        // Predicated region
        $region13: #{tpu_custom_call.1} parent=11 // pred_check
          %p242 = pneg %p138
        $region14: #{tpu_custom_call.1} parent=11 // pred_check_branch
          %244 = sbr.rel (%p242) target = $region16
        $region15: #{tpu_custom_call.1} parent=11 // pred_region
          %246 = vsyncadd [#allocation10], 0
          %s247 = sshll.u32 %s3, 4
          %s248 = int_to_ptr.hbm [resolvable:$true] %s247
          %s249 = sshll.u32 [#allocation9], 4
          %s250 = int_to_ptr.vmem [resolvable:$true] %s249
          %255 = dma.hbm_to_vmem [thread:$0]  %s248, 6144, %s250, [#allocation10], 128, 128, 8
        $region16: #{tpu_custom_call.1} parent=11 // pred_fallthru
          _
        // Predicated region
        $region17: #{tpu_custom_call.1} parent=11 // pred_check
          %p256 = pneg %p159
        $region18: #{tpu_custom_call.1} parent=11 // pred_check_branch
          %258 = sbr.rel (%p256) target = $region20
        $region19: #{tpu_custom_call.1} parent=11 // pred_region
          _
        $region20: #{tpu_custom_call.1} parent=11 // pred_fallthru
          _
        // Predicated region
        $region21: #{tpu_custom_call.1} parent=11 // pred_check
          %p259 = pneg %p180
        $region22: #{tpu_custom_call.1} parent=11 // pred_check_branch
          %261 = sbr.rel (%p259) target = $region24
        $region23: #{tpu_custom_call.1} parent=11 // pred_region
          %263 = vsyncadd [#allocation10], 0
          %s264 = sshll.u32 %s5, 4
          %s265 = int_to_ptr.hbm [resolvable:$true] %s264
          %s266 = sshll.u32 [#allocation11], 4
          %s267 = int_to_ptr.vmem [resolvable:$true] %s266
          %272 = dma.hbm_to_vmem [thread:$0]  %s265, 2048, %s267, [#allocation10], 128, 128, 8
        $region24: #{tpu_custom_call.1} parent=11 // pred_fallthru
          _
        // Predicated region
        $region25: #{tpu_custom_call.1} parent=11 // pred_check
          %p273 = pneg %p201
        $region26: #{tpu_custom_call.1} parent=11 // pred_check_branch
          %275 = sbr.rel (%p273) target = $region28
        $region27: #{tpu_custom_call.1} parent=11 // pred_region
          _
        $region28: #{tpu_custom_call.1} parent=11 // pred_fallthru
          _
      $region12: #{tpu_custom_call.1} parent=5 // pred_fallthru
        _
      %p276 = scmp.lt.s32.totalorder %s21, 2
      // Predicated region
      $region29: #{tpu_custom_call.1} parent=5 // pred_check
        %p277 = pneg %p276
      $region30: #{tpu_custom_call.1} parent=5 // pred_check_branch
        %279 = sbr.rel (%p277) target = $region32
      $region31: #{tpu_custom_call.1} parent=5 // pred_region
        // Predicated region
        $region33: #{tpu_custom_call.1} parent=31 // pred_check
          %p280 = pneg %p55
        $region34: #{tpu_custom_call.1} parent=31 // pred_check_branch
          %282 = sbr.rel (%p280) target = $region36
        $region35: #{tpu_custom_call.1} parent=31 // pred_region
          %s283 = sand.u32 %s45, 1
          %s284 = scalar_lea.sflag [#allocation4], %s283
          %s285 = sand.u32 %s45, 1
          %s286 = smul.addr %s285, 32
          %s287 = scalar_lea.vmem [#allocation3], %s286
          %s288 = smul.u32 8, %s28
          %290 = vsyncadd %s284, 0
          %s291 = smul.addr %s288, 2
          %s292 = sadd.s32 %s29, %s291
          %s293 = smul.addr %s292, 4
          %s294 = scalar_lea.hbm %s0, %s293
          %s295 = sshll.u32 %s294, 4
          %s296 = int_to_ptr.hbm [resolvable:$true] %s295
          %s297 = sshll.u32 %s287, 4
          %s298 = int_to_ptr.vmem [resolvable:$true] %s297
          %303 = dma.hbm_to_vmem [thread:$0]  %s296, 512, %s298, %s284, 128, 64, 4
        $region36: #{tpu_custom_call.1} parent=31 // pred_fallthru
          _
        // Predicated region
        $region37: #{tpu_custom_call.1} parent=31 // pred_check
          %p304 = pneg %p83
        $region38: #{tpu_custom_call.1} parent=31 // pred_check_branch
          %306 = sbr.rel (%p304) target = $region40
        $region39: #{tpu_custom_call.1} parent=31 // pred_region
          %s307 = sand.u32 %s21, 1
          %s308 = scalar_lea.sflag [#allocation7], %s307
          %s309 = sand.u32 %s73, 1
          %s310 = smul.addr %s309, 32
          %s311 = scalar_lea.vmem [#allocation6], %s310
          %s312 = smul.u32 8, %s28
          %314 = vsyncadd %s308, 0
          %s315 = smul.addr %s312, 2
          %s316 = sadd.s32 %s29, %s315
          %s317 = smul.addr %s316, 4
          %s318 = scalar_lea.hbm %s1, %s317
          %s319 = sshll.u32 %s318, 4
          %s320 = int_to_ptr.hbm [resolvable:$true] %s319
          %s321 = sshll.u32 %s311, 4
          %s322 = int_to_ptr.vmem [resolvable:$true] %s321
          %327 = dma.hbm_to_vmem [thread:$0]  %s320, 512, %s322, %s308, 128, 64, 4
        $region40: #{tpu_custom_call.1} parent=31 // pred_fallthru
          _
        // Predicated region
        $region41: #{tpu_custom_call.1} parent=31 // pred_check
          %p328 = pneg %p111
        $region42: #{tpu_custom_call.1} parent=31 // pred_check_branch
          %330 = sbr.rel (%p328) target = $region44
        $region43: #{tpu_custom_call.1} parent=31 // pred_region
          %s331 = sand.u32 %s21, 1
          %s332 = scalar_lea.sflag [#allocation7], %s331
          %s333 = sand.u32 %s101, 1
          %s334 = smul.addr %s333, 32
          %s335 = scalar_lea.vmem [#allocation8], %s334
          %s336 = smul.u32 8, %s28
          %338 = vsyncadd %s332, 0
          %s339 = smul.addr %s336, 2
          %s340 = sadd.s32 %s29, %s339
          %s341 = smul.addr %s340, 4
          %s342 = scalar_lea.hbm %s2, %s341
          %s343 = sshll.u32 %s342, 4
          %s344 = int_to_ptr.hbm [resolvable:$true] %s343
          %s345 = sshll.u32 %s335, 4
          %s346 = int_to_ptr.vmem [resolvable:$true] %s345
          %351 = dma.hbm_to_vmem [thread:$0]  %s344, 512, %s346, %s332, 128, 64, 4
        $region44: #{tpu_custom_call.1} parent=31 // pred_fallthru
          _
      $region32: #{tpu_custom_call.1} parent=5 // pred_fallthru
        _
      %p352 = scmp.le.s32.totalorder 1, %s21
      %p353 = scmp.lt.s32.totalorder %s21, 3
      %p354 = pnand %p352, %p353
      %p355 = pneg %p354
      // Predicated region
      $region45: #{tpu_custom_call.1} parent=5 // pred_check
        _
      $region46: #{tpu_custom_call.1} parent=5 // pred_check_branch
        %357 = sbr.rel (%p354) target = $region48
      $region47: #{tpu_custom_call.1} parent=5 // pred_region
        %s358 = ssub.s32 %s21, 1
        %s359 = sand.u32 %s48, 1
        %s360 = scalar_lea.sflag [#allocation4], %s359
        %s361 = sand.u32 %s48, 1
        %s362 = smul.addr %s361, 32
        %s363 = scalar_lea.vmem [#allocation3], %s362
        // Predicated region
        $region49: #{tpu_custom_call.1} parent=47 // pred_check
          %p364 = pneg %p61
        $region50: #{tpu_custom_call.1} parent=47 // pred_check_branch
          %366 = sbr.rel (%p364) target = $region52
        $region51: #{tpu_custom_call.1} parent=47 // pred_region
          %368 = dma.done %s360, 512
        $region52: #{tpu_custom_call.1} parent=47 // pred_fallthru
          _
        %s369 = sand.u32 %s26, 1
        %s370 = scalar_lea.sflag [#allocation7], %s369
        %s371 = sand.u32 %s76, 1
        %s372 = smul.addr %s371, 32
        %s373 = scalar_lea.vmem [#allocation6], %s372
        // Predicated region
        $region53: #{tpu_custom_call.1} parent=47 // pred_check
          %p374 = pneg %p89
        $region54: #{tpu_custom_call.1} parent=47 // pred_check_branch
          %376 = sbr.rel (%p374) target = $region56
        $region55: #{tpu_custom_call.1} parent=47 // pred_region
          %378 = dma.done %s370, 512
        $region56: #{tpu_custom_call.1} parent=47 // pred_fallthru
          _
        %s379 = sand.u32 %s26, 1
        %s380 = scalar_lea.sflag [#allocation7], %s379
        %s381 = sand.u32 %s104, 1
        %s382 = smul.addr %s381, 32
        %s383 = scalar_lea.vmem [#allocation8], %s382
        // Predicated region
        $region57: #{tpu_custom_call.1} parent=47 // pred_check
          %p384 = pneg %p117
        $region58: #{tpu_custom_call.1} parent=47 // pred_check_branch
          %386 = sbr.rel (%p384) target = $region60
        $region59: #{tpu_custom_call.1} parent=47 // pred_region
          %388 = dma.done %s380, 512
        $region60: #{tpu_custom_call.1} parent=47 // pred_fallthru
          _
        // Predicated region
        $region61: #{tpu_custom_call.1} parent=47 // pred_check
          %p389 = pneg %p138
        $region62: #{tpu_custom_call.1} parent=47 // pred_check_branch
          %391 = sbr.rel (%p389) target = $region64
        $region63: #{tpu_custom_call.1} parent=47 // pred_region
          %393 = dma.done [#allocation10], 6144
        $region64: #{tpu_custom_call.1} parent=47 // pred_fallthru
          _
        // Predicated region
        $region65: #{tpu_custom_call.1} parent=47 // pred_check
          %p394 = pneg %p180
        $region66: #{tpu_custom_call.1} parent=47 // pred_check_branch
          %396 = sbr.rel (%p394) target = $region68
        $region67: #{tpu_custom_call.1} parent=47 // pred_region
          %398 = dma.done [#allocation10], 2048
        $region68: #{tpu_custom_call.1} parent=47 // pred_fallthru
          _
        %s399 = sand.u32 %s48, 1
        %s400 = scalar_lea.sflag [#allocation4], %s399
        %s401 = sand.u32 %s48, 1
        %s402 = smul.addr %s401, 32
        %s403 = scalar_lea.vmem [#allocation3], %s402
        %p404 = pneg %p61
        %p405 = pneg %p58
        %s406 = sand.u32 %s26, 1
        %s407 = scalar_lea.sflag [#allocation7], %s406
        %s408 = sand.u32 %s76, 1
        %s409 = smul.addr %s408, 32
        %s410 = scalar_lea.vmem [#allocation6], %s409
        %p411 = pneg %p89
        %p412 = pneg %p86
        %s413 = sand.u32 %s26, 1
        %s414 = scalar_lea.sflag [#allocation7], %s413
        %s415 = sand.u32 %s104, 1
        %s416 = smul.addr %s415, 32
        %s417 = scalar_lea.vmem [#allocation8], %s416
        %p418 = pneg %p117
        %p419 = pneg %p114
        %p420 = pneg %p138
        %p421 = pneg %p135
        %p422 = pneg %p159
        %p423 = pneg %p156
        %p424 = pneg %p180
        %p425 = pneg %p177
        %p426 = pneg %p201
        %p427 = pneg %p198
        %p428 = pneg %p227
        %p429 = pneg %p224
        %s430 = smul.u32 8, %s30
        %s431 = smul.u32 8, %s30
        %s432 = smul.u32 8, %s30
        %p433 = scmp.eq.s32.totalorder %s31, 0
        // Predicated region
        $region69: #{tpu_custom_call.1} parent=47 // pred_check
          %p434 = pneg %p433
        $region70: #{tpu_custom_call.1} parent=47 // pred_check_branch
          %436 = sbr.rel (%p434) target = $region72
        $region71: #{tpu_custom_call.1} parent=47 // pred_region
          %437 = vst [vmem:[#allocation2] sm:$0xff] 0.0
          %438 = vst [vmem:[#allocation2 + $0x8] sm:$0xff] 0.0
          %439 = vst [vmem:[#allocation2 + $0x10] sm:$0xff] 0.0
        $region72: #{tpu_custom_call.1} parent=47 // pred_fallthru
          _
        %v440 = vld [vmem:[%s363] sm:$0xf]
        %v441 = vld [vmem:[%s363 + $0x4] sm:$0xf]
        %v442 = vld [vmem:[%s363 + $0x8] sm:$0xf]
        %v443 = vld [vmem:[%s363 + $0xc] sm:$0xf]
        %v444 = vld [vmem:[%s363 + $0x10] sm:$0xf]
        %v445 = vld [vmem:[%s363 + $0x14] sm:$0xf]
        %v446 = vld [vmem:[%s363 + $0x18] sm:$0xf]
        %v447 = vld [vmem:[%s363 + $0x1c] sm:$0xf]
        %v448 = vunpack.c.l.bf16 %v440
        %v449 = vunpack.c.l.bf16 %v441
        %v450 = vunpack.c.l.bf16 %v442
        %v451 = vunpack.c.l.bf16 %v443
        %v452 = vunpack.c.l.bf16 %v444
        %v453 = vunpack.c.l.bf16 %v445
        %v454 = vunpack.c.l.bf16 %v446
        %v455 = vunpack.c.l.bf16 %v447
        %v456 = vrot.slane %v448, 4
        %v457 = vadd.f32 %v448, %v456
        %v458 = vrot.slane %v457, 2
        %v459 = vadd.f32 %v457, %v458
        %v460 = vrot.slane %v459, 1
        %v461 = vadd.f32 %v459, %v460
        %v462 = vrot.slane %v449, 4
        %v463 = vadd.f32 %v449, %v462
        %v464 = vrot.slane %v463, 2
        %v465 = vadd.f32 %v463, %v464
        %v466 = vrot.slane %v465, 1
        %v467 = vadd.f32 %v465, %v466
        %v468 = vrot.slane %v450, 4
        %v469 = vadd.f32 %v450, %v468
        %v470 = vrot.slane %v469, 2
        %v471 = vadd.f32 %v469, %v470
        %v472 = vrot.slane %v471, 1
        %v473 = vadd.f32 %v471, %v472
        %v474 = vrot.slane %v451, 4
        %v475 = vadd.f32 %v451, %v474
        %v476 = vrot.slane %v475, 2
        %v477 = vadd.f32 %v475, %v476
        %v478 = vrot.slane %v477, 1
        %v479 = vadd.f32 %v477, %v478
        %v480 = vrot.slane %v452, 4
        %v481 = vadd.f32 %v452, %v480
        %v482 = vrot.slane %v481, 2
        %v483 = vadd.f32 %v481, %v482
        %v484 = vrot.slane %v483, 1
        %v485 = vadd.f32 %v483, %v484
        %v486 = vrot.slane %v453, 4
        %v487 = vadd.f32 %v453, %v486
        %v488 = vrot.slane %v487, 2
        %v489 = vadd.f32 %v487, %v488
        %v490 = vrot.slane %v489, 1
        %v491 = vadd.f32 %v489, %v490
        %v492 = vrot.slane %v454, 4
        %v493 = vadd.f32 %v454, %v492
        %v494 = vrot.slane %v493, 2
        %v495 = vadd.f32 %v493, %v494
        %v496 = vrot.slane %v495, 1
        %v497 = vadd.f32 %v495, %v496
        %v498 = vrot.slane %v455, 4
        %v499 = vadd.f32 %v455, %v498
        %v500 = vrot.slane %v499, 2
        %v501 = vadd.f32 %v499, %v500
        %v502 = vrot.slane %v501, 1
        %v503 = vadd.f32 %v501, %v502
        %v504 = vld [vmem:[%s373] sm:$0xf]
        %v505 = vld [vmem:[%s373 + $0x4] sm:$0xf]
        %v506 = vld [vmem:[%s373 + $0x8] sm:$0xf]
        %v507 = vld [vmem:[%s373 + $0xc] sm:$0xf]
        %v508 = vld [vmem:[%s373 + $0x10] sm:$0xf]
        %v509 = vld [vmem:[%s373 + $0x14] sm:$0xf]
        %v510 = vld [vmem:[%s373 + $0x18] sm:$0xf]
        %v511 = vld [vmem:[%s373 + $0x1c] sm:$0xf]
        %v512 = vunpack.c.l.bf16 %v504
        %v513 = vunpack.c.l.bf16 %v505
        %v514 = vunpack.c.l.bf16 %v506
        %v515 = vunpack.c.l.bf16 %v507
        %v516 = vunpack.c.l.bf16 %v508
        %v517 = vunpack.c.l.bf16 %v509
        %v518 = vunpack.c.l.bf16 %v510
        %v519 = vunpack.c.l.bf16 %v511
        %v520 = vrot.slane %v512, 4
        %v521 = vadd.f32 %v512, %v520
        %v522 = vrot.slane %v521, 2
        %v523 = vadd.f32 %v521, %v522
        %v524 = vrot.slane %v523, 1
        %v525 = vadd.f32 %v523, %v524
        %v526 = vrot.slane %v513, 4
        %v527 = vadd.f32 %v513, %v526
        %v528 = vrot.slane %v527, 2
        %v529 = vadd.f32 %v527, %v528
        %v530 = vrot.slane %v529, 1
        %v531 = vadd.f32 %v529, %v530
        %v532 = vrot.slane %v514, 4
        %v533 = vadd.f32 %v514, %v532
        %v534 = vrot.slane %v533, 2
        %v535 = vadd.f32 %v533, %v534
        %v536 = vrot.slane %v535, 1
        %v537 = vadd.f32 %v535, %v536
        %v538 = vrot.slane %v515, 4
        %v539 = vadd.f32 %v515, %v538
        %v540 = vrot.slane %v539, 2
        %v541 = vadd.f32 %v539, %v540
        %v542 = vrot.slane %v541, 1
        %v543 = vadd.f32 %v541, %v542
        %v544 = vrot.slane %v516, 4
        %v545 = vadd.f32 %v516, %v544
        %v546 = vrot.slane %v545, 2
        %v547 = vadd.f32 %v545, %v546
        %v548 = vrot.slane %v547, 1
        %v549 = vadd.f32 %v547, %v548
        %v550 = vrot.slane %v517, 4
        %v551 = vadd.f32 %v517, %v550
        %v552 = vrot.slane %v551, 2
        %v553 = vadd.f32 %v551, %v552
        %v554 = vrot.slane %v553, 1
        %v555 = vadd.f32 %v553, %v554
        %v556 = vrot.slane %v518, 4
        %v557 = vadd.f32 %v518, %v556
        %v558 = vrot.slane %v557, 2
        %v559 = vadd.f32 %v557, %v558
        %v560 = vrot.slane %v559, 1
        %v561 = vadd.f32 %v559, %v560
        %v562 = vrot.slane %v519, 4
        %v563 = vadd.f32 %v519, %v562
        %v564 = vrot.slane %v563, 2
        %v565 = vadd.f32 %v563, %v564
        %v566 = vrot.slane %v565, 1
        %v567 = vadd.f32 %v565, %v566
        %v568 = vld [vmem:[%s383] sm:$0xf]
        %v569 = vld [vmem:[%s383 + $0x4] sm:$0xf]
        %v570 = vld [vmem:[%s383 + $0x8] sm:$0xf]
        %v571 = vld [vmem:[%s383 + $0xc] sm:$0xf]
        %v572 = vld [vmem:[%s383 + $0x10] sm:$0xf]
        %v573 = vld [vmem:[%s383 + $0x14] sm:$0xf]
        %v574 = vld [vmem:[%s383 + $0x18] sm:$0xf]
        %v575 = vld [vmem:[%s383 + $0x1c] sm:$0xf]
        %v576 = vunpack.c.l.bf16 %v568
        %v577 = vunpack.c.l.bf16 %v569
        %v578 = vunpack.c.l.bf16 %v570
        %v579 = vunpack.c.l.bf16 %v571
        %v580 = vunpack.c.l.bf16 %v572
        %v581 = vunpack.c.l.bf16 %v573
        %v582 = vunpack.c.l.bf16 %v574
        %v583 = vunpack.c.l.bf16 %v575
        %v584 = vrot.slane %v576, 4
        %v585 = vadd.f32 %v576, %v584
        %v586 = vrot.slane %v585, 2
        %v587 = vadd.f32 %v585, %v586
        %v588 = vrot.slane %v587, 1
        %v589 = vadd.f32 %v587, %v588
        %v590 = vrot.slane %v577, 4
        %v591 = vadd.f32 %v577, %v590
        %v592 = vrot.slane %v591, 2
        %v593 = vadd.f32 %v591, %v592
        %v594 = vrot.slane %v593, 1
        %v595 = vadd.f32 %v593, %v594
        %v596 = vrot.slane %v578, 4
        %v597 = vadd.f32 %v578, %v596
        %v598 = vrot.slane %v597, 2
        %v599 = vadd.f32 %v597, %v598
        %v600 = vrot.slane %v599, 1
        %v601 = vadd.f32 %v599, %v600
        %v602 = vrot.slane %v579, 4
        %v603 = vadd.f32 %v579, %v602
        %v604 = vrot.slane %v603, 2
        %v605 = vadd.f32 %v603, %v604
        %v606 = vrot.slane %v605, 1
        %v607 = vadd.f32 %v605, %v606
        %v608 = vrot.slane %v580, 4
        %v609 = vadd.f32 %v580, %v608
        %v610 = vrot.slane %v609, 2
        %v611 = vadd.f32 %v609, %v610
        %v612 = vrot.slane %v611, 1
        %v613 = vadd.f32 %v611, %v612
        %v614 = vrot.slane %v581, 4
        %v615 = vadd.f32 %v581, %v614
        %v616 = vrot.slane %v615, 2
        %v617 = vadd.f32 %v615, %v616
        %v618 = vrot.slane %v617, 1
        %v619 = vadd.f32 %v617, %v618
        %v620 = vrot.slane %v582, 4
        %v621 = vadd.f32 %v582, %v620
        %v622 = vrot.slane %v621, 2
        %v623 = vadd.f32 %v621, %v622
        %v624 = vrot.slane %v623, 1
        %v625 = vadd.f32 %v623, %v624
        %v626 = vrot.slane %v583, 4
        %v627 = vadd.f32 %v583, %v626
        %v628 = vrot.slane %v627, 2
        %v629 = vadd.f32 %v627, %v628
        %v630 = vrot.slane %v629, 1
        %v631 = vadd.f32 %v629, %v630
        %v632 = vld [vmem:[#allocation2] sm:$0xff]
        %vm641 = vcmask 1041409
        %v642 = vsel %vm641, %v467, %v461
        %vm643 = vcmask 1042434
        %v644 = vsel %vm643, %v473, %v642
        %vm645 = vcmask 1043459
        %v646 = vsel %vm645, %v479, %v644
        %vm647 = vcmask 1044484
        %v648 = vsel %vm647, %v485, %v646
        %vm649 = vcmask 1045509
        %v650 = vsel %vm649, %v491, %v648
        %vm651 = vcmask 1046534
        %v652 = vsel %vm651, %v497, %v650
        %vm653 = vcmask 1047559
        %v654 = vsel %vm653, %v503, %v652
        %v656 = vadd.f32 %v632, %v654
        %657 = vst [vmem:[#allocation2] sm:$0xff] %v656
        %v658 = vld [vmem:[#allocation2 + $0x8] sm:$0xff]
        %v667 = vsel %vm641, %v531, %v525
        %v668 = vsel %vm643, %v537, %v667
        %v669 = vsel %vm645, %v543, %v668
        %v670 = vsel %vm647, %v549, %v669
        %v671 = vsel %vm649, %v555, %v670
        %v672 = vsel %vm651, %v561, %v671
        %v673 = vsel %vm653, %v567, %v672
        %v675 = vadd.f32 %v658, %v673
        %676 = vst [vmem:[#allocation2 + $0x8] sm:$0xff] %v675
        %v677 = vld [vmem:[#allocation2 + $0x10] sm:$0xff]
        %v686 = vsel %vm641, %v595, %v589
        %v687 = vsel %vm643, %v601, %v686
        %v688 = vsel %vm645, %v607, %v687
        %v689 = vsel %vm647, %v613, %v688
        %v690 = vsel %vm649, %v619, %v689
        %v691 = vsel %vm651, %v625, %v690
        %v692 = vsel %vm653, %v631, %v691
        %v694 = vadd.f32 %v677, %v692
        %695 = vst [vmem:[#allocation2 + $0x10] sm:$0xff] %v694
        %p696 = scmp.eq.s32.totalorder %s31, 1
        // Predicated region
        $region73: #{tpu_custom_call.1} parent=47 // pred_check
          %p697 = pneg %p696
        $region74: #{tpu_custom_call.1} parent=47 // pred_check_branch
          %699 = sbr.rel (%p697) target = $region76
        $region75: #{tpu_custom_call.1} parent=47 // pred_region
          %v700 = vld [vmem:[#allocation2] sm:$0xff]
          %v701 = vld [vmem:[#allocation2 + $0x8] sm:$0xff]
          %v702 = vld [vmem:[#allocation2 + $0x10] sm:$0xff]
          %v703 = vmul.f32 %v700, 0.0625
          %v704 = vmul.f32 %v701, 0.0625
          %v705 = vmul.f32 %v702, 0.0625
          %v706 = vld [vmem:[#allocation9] sm:$0xff]
          %v707 = vld [vmem:[#allocation9 + $0x8] sm:$0xff]
          %v708 = vld [vmem:[#allocation9 + $0x10] sm:$0xff]
          %v709 = vld [vmem:[#allocation9 + $0x18] sm:$0xff]
          %v710 = vld [vmem:[#allocation9 + $0x20] sm:$0xff]
          %v711 = vld [vmem:[#allocation9 + $0x28] sm:$0xff]
          %v712 = vld [vmem:[#allocation9 + $0x30] sm:$0xff]
          %v713 = vld [vmem:[#allocation9 + $0x38] sm:$0xff]
          %v714 = vld [vmem:[#allocation9 + $0x40] sm:$0xff]
          %v715 = vld [vmem:[#allocation9 + $0x48] sm:$0xff]
          %v716 = vld [vmem:[#allocation9 + $0x50] sm:$0xff]
          %v717 = vld [vmem:[#allocation9 + $0x58] sm:$0xff]
          %v718 = vld [vmem:[#allocation9 + $0x60] sm:$0xff]
          %v719 = vld [vmem:[#allocation9 + $0x68] sm:$0xff]
          %v720 = vld [vmem:[#allocation9 + $0x70] sm:$0xff]
          %v721 = vld [vmem:[#allocation9 + $0x78] sm:$0xff]
          %v722 = vld [vmem:[#allocation9 + $0x80] sm:$0xff]
          %v723 = vld [vmem:[#allocation9 + $0x88] sm:$0xff]
          %v724 = vld [vmem:[#allocation9 + $0x90] sm:$0xff]
          %v725 = vld [vmem:[#allocation9 + $0x98] sm:$0xff]
          %v726 = vld [vmem:[#allocation9 + $0xa0] sm:$0xff]
          %v727 = vld [vmem:[#allocation9 + $0xa8] sm:$0xff]
          %v728 = vld [vmem:[#allocation9 + $0xb0] sm:$0xff]
          %v729 = vld [vmem:[#allocation9 + $0xb8] sm:$0xff]
          %v730 = vld [vmem:[#allocation9 + $0xc0] sm:$0xff]
          %v731 = vld [vmem:[#allocation9 + $0xc8] sm:$0xff]
          %v732 = vld [vmem:[#allocation9 + $0xd0] sm:$0xff]
          %v733 = vld [vmem:[#allocation9 + $0xd8] sm:$0xff]
          %v734 = vld [vmem:[#allocation9 + $0xe0] sm:$0xff]
          %v735 = vld [vmem:[#allocation9 + $0xe8] sm:$0xff]
          %v736 = vld [vmem:[#allocation9 + $0xf0] sm:$0xff]
          %v737 = vld [vmem:[#allocation9 + $0xf8] sm:$0xff]
          %v738 = vld [vmem:[#allocation9 + $0x100] sm:$0xff]
          %v739 = vld [vmem:[#allocation9 + $0x108] sm:$0xff]
          %v740 = vld [vmem:[#allocation9 + $0x110] sm:$0xff]
          %v741 = vld [vmem:[#allocation9 + $0x118] sm:$0xff]
          %v742 = vld [vmem:[#allocation9 + $0x120] sm:$0xff]
          %v743 = vld [vmem:[#allocation9 + $0x128] sm:$0xff]
          %v744 = vld [vmem:[#allocation9 + $0x130] sm:$0xff]
          %v745 = vld [vmem:[#allocation9 + $0x138] sm:$0xff]
          %v746 = vld [vmem:[#allocation9 + $0x140] sm:$0xff]
          %v747 = vld [vmem:[#allocation9 + $0x148] sm:$0xff]
          %v748 = vld [vmem:[#allocation9 + $0x150] sm:$0xff]
          %v749 = vld [vmem:[#allocation9 + $0x158] sm:$0xff]
          %v750 = vld [vmem:[#allocation9 + $0x160] sm:$0xff]
          %v751 = vld [vmem:[#allocation9 + $0x168] sm:$0xff]
          %v752 = vld [vmem:[#allocation9 + $0x170] sm:$0xff]
          %v753 = vld [vmem:[#allocation9 + $0x178] sm:$0xff]
          %v754 = vld [vmem:[%s4] sm:$0x1]
          %v756 = vperm.slane %v754, 0
          %758 = vmatpush.msra.mxu0 %v721
          %759 = vmatpush.msra.mxu0 %v720
          %760 = vmatpush.msra.mxu0 %v719
          %761 = vmatpush.msra.mxu0 %v718
          %762 = vmatpush.msra.mxu0 %v717
          %763 = vmatpush.msra.mxu0 %v716
          %764 = vmatpush.msra.mxu0 %v715
          %765 = vmatpush.msra.mxu0 %v714
          %766 = vmatpush.msra.mxu0 %v713
          %767 = vmatpush.msra.mxu0 %v712
          %768 = vmatpush.msra.mxu0 %v711
          %769 = vmatpush.msra.mxu0 %v710
          %770 = vmatpush.msra.mxu0 %v709
          %771 = vmatpush.msra.mxu0 %v708
          %772 = vmatpush.msra.mxu0 %v707
          %773 = vmatpush.msra.mxu0 %v706
          %774 = vmatmul.f32.gmra.mxu0 %v703
          %v775 = vpop.f32.mrf.mxu0
          %v776 = vadd.f32 %v756, %v775
          %777 = vdwg.mxu0
          %778 = vmatpush.msra.mxu0 %v737
          %779 = vmatpush.msra.mxu0 %v736
          %780 = vmatpush.msra.mxu0 %v735
          %781 = vmatpush.msra.mxu0 %v734
          %782 = vmatpush.msra.mxu0 %v733
          %783 = vmatpush.msra.mxu0 %v732
          %784 = vmatpush.msra.mxu0 %v731
          %785 = vmatpush.msra.mxu0 %v730
          %786 = vmatpush.msra.mxu0 %v729
          %787 = vmatpush.msra.mxu0 %v728
          %788 = vmatpush.msra.mxu0 %v727
          %789 = vmatpush.msra.mxu0 %v726
          %790 = vmatpush.msra.mxu0 %v725
          %791 = vmatpush.msra.mxu0 %v724
          %792 = vmatpush.msra.mxu0 %v723
          %793 = vmatpush.msra.mxu0 %v722
          %794 = vmatmul.f32.gmra.mxu0 %v704
          %v795 = vpop.f32.mrf.mxu0
          %v796 = vadd.f32 %v776, %v795
          %797 = vdwg.mxu0
          %798 = vmatpush.msra.mxu0 %v753
          %799 = vmatpush.msra.mxu0 %v752
          %800 = vmatpush.msra.mxu0 %v751
          %801 = vmatpush.msra.mxu0 %v750
          %802 = vmatpush.msra.mxu0 %v749
          %803 = vmatpush.msra.mxu0 %v748
          %804 = vmatpush.msra.mxu0 %v747
          %805 = vmatpush.msra.mxu0 %v746
          %806 = vmatpush.msra.mxu0 %v745
          %807 = vmatpush.msra.mxu0 %v744
          %808 = vmatpush.msra.mxu0 %v743
          %809 = vmatpush.msra.mxu0 %v742
          %810 = vmatpush.msra.mxu0 %v741
          %811 = vmatpush.msra.mxu0 %v740
          %812 = vmatpush.msra.mxu0 %v739
          %813 = vmatpush.msra.mxu0 %v738
          %814 = vmatmul.f32.gmra.mxu0 %v705
          %v815 = vpop.f32.mrf.mxu0
          %v816 = vadd.f32 %v796, %v815
          %817 = vdwg.mxu0
          %v818 = vmax.f32 %v816, 0.0
          %v819 = vld [vmem:[#allocation11] sm:$0xff]
          %v820 = vld [vmem:[#allocation11 + $0x8] sm:$0xff]
          %v821 = vld [vmem:[#allocation11 + $0x10] sm:$0xff]
          %v822 = vld [vmem:[#allocation11 + $0x18] sm:$0xff]
          %v823 = vld [vmem:[#allocation11 + $0x20] sm:$0xff]
          %v824 = vld [vmem:[#allocation11 + $0x28] sm:$0xff]
          %v825 = vld [vmem:[#allocation11 + $0x30] sm:$0xff]
          %v826 = vld [vmem:[#allocation11 + $0x38] sm:$0xff]
          %v827 = vld [vmem:[#allocation11 + $0x40] sm:$0xff]
          %v828 = vld [vmem:[#allocation11 + $0x48] sm:$0xff]
          %v829 = vld [vmem:[#allocation11 + $0x50] sm:$0xff]
          %v830 = vld [vmem:[#allocation11 + $0x58] sm:$0xff]
          %v831 = vld [vmem:[#allocation11 + $0x60] sm:$0xff]
          %v832 = vld [vmem:[#allocation11 + $0x68] sm:$0xff]
          %v833 = vld [vmem:[#allocation11 + $0x70] sm:$0xff]
          %v834 = vld [vmem:[#allocation11 + $0x78] sm:$0xff]
          %v835 = vld [vmem:[%s6] sm:$0x1]
          %v837 = vperm.slane %v835, 0
          %839 = vmatpush.msra.mxu0 %v834
          %840 = vmatpush.msra.mxu0 %v833
          %841 = vmatpush.msra.mxu0 %v832
          %842 = vmatpush.msra.mxu0 %v831
          %843 = vmatpush.msra.mxu0 %v830
          %844 = vmatpush.msra.mxu0 %v829
          %845 = vmatpush.msra.mxu0 %v828
          %846 = vmatpush.msra.mxu0 %v827
          %847 = vmatpush.msra.mxu0 %v826
          %848 = vmatpush.msra.mxu0 %v825
          %849 = vmatpush.msra.mxu0 %v824
          %850 = vmatpush.msra.mxu0 %v823
          %851 = vmatpush.msra.mxu0 %v822
          %852 = vmatpush.msra.mxu0 %v821
          %853 = vmatpush.msra.mxu0 %v820
          %854 = vmatpush.msra.mxu0 %v819
          %855 = vmatmul.f32.gmra.mxu0 %v818
          %v856 = vpop.f32.mrf.mxu0
          %v857 = vadd.f32 %v837, %v856
          %858 = vdwg.mxu0
          %v859 = vlaneseq
          %v860 = vand.u32 %v859, 127
          %vm861 = vcmp.lt.s32.totalorder %v860, 4
          %v862 = vsel %vm861, %v857, -1e+30
          %863 = vmax.xlane.f32.xlu0 %v862
          %v864 = vpop.xlane.xlu0 %863
          %v865 = vsub.f32 %v862, %v864
          %v866 = vmul.f32 %v865, 1.442695
          %v867 = vpow.pop %v866
          %868 = vadd.xlane.f32.xlu0 %v867
          %v869 = vpop.xlane.xlu0 %868
          %v870 = vlog2.pop %v869
          %v871 = vmul.f32 %v870, 0.6931472
          %v872 = vsub.f32 %v865, %v871
          %873 = vst [vmem:[#allocation12] sm:$0xff] %v872
        $region76: #{tpu_custom_call.1} parent=47 // pred_fallthru
          _
        // Predicated region
        $region77: #{tpu_custom_call.1} parent=47 // pred_check
          %p874 = pneg %p224
        $region78: #{tpu_custom_call.1} parent=47 // pred_check_branch
          %876 = sbr.rel (%p874) target = $region80
        $region79: #{tpu_custom_call.1} parent=47 // pred_region
          %878 = vsyncadd [#allocation5], 0
          %s879 = smul.addr %s30, 8
          %s880 = scalar_lea.hbm %s7, %s879
          %s882 = sshll.u32 [#allocation12], 4
          %s883 = int_to_ptr.vmem [resolvable:$true] %s882
          %s884 = sshll.u32 %s880, 4
          %s885 = int_to_ptr.hbm [resolvable:$true] %s884
          %887 = dma.vmem_to_hbm [thread:$0]  %s883, 128, %s885, [#allocation5]
        $region80: #{tpu_custom_call.1} parent=47 // pred_fallthru
          _
        // Predicated region
        $region81: #{tpu_custom_call.1} parent=47 // pred_check
          %p888 = pneg %p224
        $region82: #{tpu_custom_call.1} parent=47 // pred_check_branch
          %890 = sbr.rel (%p888) target = $region84
        $region83: #{tpu_custom_call.1} parent=47 // pred_region
          %892 = dma.done [#allocation5], 128
        $region84: #{tpu_custom_call.1} parent=47 // pred_fallthru
          _
      $region48: #{tpu_custom_call.1} parent=5 // pred_fallthru
        _
      %p893 = scmp.le.s32.totalorder 2, %s21
      // Predicated region
      $region85: #{tpu_custom_call.1} parent=5 // pred_check
        %p894 = pneg %p893
      $region86: #{tpu_custom_call.1} parent=5 // pred_check_branch
        %896 = sbr.rel (%p894) target = $region88
      $region87: #{tpu_custom_call.1} parent=5 // pred_region
        %s897 = ssub.s32 %s21, 2
      $region88: #{tpu_custom_call.1} parent=5 // pred_fallthru
        _
    $region6: #{tpu_custom_call.1} parent=1 // loop_footer
      %s25 = sadd.s32 1, %s21
    $region7: #{tpu_custom_call.1} parent=1 // loop_footer_branch
      %20 = sbr.rel target = $region3
    $region8: #{tpu_custom_call.1} parent=1 // loop_exit
      _
    %898 = vsyncpa [#allocation4], 1
    %s899 = scalar_lea.sflag [#allocation4], 1
    %900 = vsyncpa %s899, 1
    %901 = vsyncpa [#allocation7], 1
    %s902 = scalar_lea.sflag [#allocation7], 1
    %903 = vsyncpa %s902, 1
    %904 = vsyncpa [#allocation10], 1
    %905 = vsyncpa [#allocation5], 1
    %s906 = scalar_lea.sflag [#allocation5], 1
    %907 = vsyncpa %s906, 1

</llo_original>
